<compile_context>
chip_gen: v7x
topology: tpu7x:2x2x1
jax: 0.10.0
libtpu: 0.0.40
codegen_flags: <defaults>
</compile_context>

<pallas_src>
import jax
import jax.numpy as jnp
from jax.experimental import pallas as pl
from jax.experimental.pallas import tpu as pltpu


_VMEM_SPEC = pl.BlockSpec(memory_space=pltpu.MemorySpace.VMEM)
_VMEM_LIMIT = 4 * 1024 * 1024   # actual footprint ~120 KiB; leave XLA headroom


# ----------------------------------------------------------------------------
# Pallas kernels
#   x  : [Bp, Dp]  bf16   pooled tokens (zero-padded rows/cols)
#   w  : [Dp, Ep]  bf16   fused projection (w1 @ w2, zero-padded)
#   b  : [1,  Ep]  f32    fused bias (b1 @ w2), added in f32
#   o  : [Bp, Ep]  bf16   L2-normalized features
# ----------------------------------------------------------------------------
def _single_head_kernel(x_ref, w_ref, b_ref, o_ref):
    feat = jnp.dot(x_ref[...], w_ref[...],
                   preferred_element_type=jnp.float32) + b_ref[...]
    inv_norm = jax.lax.rsqrt(
        jnp.sum(feat * feat, axis=-1, keepdims=True) + 1e-12)   # EUP
    o_ref[...] = (feat * inv_norm).astype(o_ref.dtype)


def _dual_head_kernel(xi_ref, wi_ref, bi_ref, xt_ref, wt_ref, bt_ref,
                      oi_ref, ot_ref):
    # Image tower.
    fi = jnp.dot(xi_ref[...], wi_ref[...],
                 preferred_element_type=jnp.float32) + bi_ref[...]
    inv_i = jax.lax.rsqrt(jnp.sum(fi * fi, axis=-1, keepdims=True) + 1e-12)
    oi_ref[...] = (fi * inv_i).astype(oi_ref.dtype)
    # Text tower.
    ft = jnp.dot(xt_ref[...], wt_ref[...],
                 preferred_element_type=jnp.float32) + bt_ref[...]
    inv_t = jax.lax.rsqrt(jnp.sum(ft * ft, axis=-1, keepdims=True) + 1e-12)
    ot_ref[...] = (ft * inv_t).astype(ot_ref.dtype)


def _single_head(x, w, b, out_dtype):
    Bp, Dp = x.shape
    Ep = w.shape[1]
    flops = 2 * Bp * Dp * Ep
    bytes_accessed = int(x.size * x.dtype.itemsize
                         + w.size * w.dtype.itemsize
                         + b.size * b.dtype.itemsize
                         + Bp * Ep * jnp.dtype(out_dtype).itemsize)
    return pl.pallas_call(
        _single_head_kernel,
        out_shape=jax.ShapeDtypeStruct((Bp, Ep), out_dtype),
        in_specs=[_VMEM_SPEC, _VMEM_SPEC, _VMEM_SPEC],
        out_specs=_VMEM_SPEC,
        compiler_params=pltpu.CompilerParams(vmem_limit_bytes=_VMEM_LIMIT),
        cost_estimate=pl.CostEstimate(
            flops=flops, transcendentals=Bp, bytes_accessed=bytes_accessed),
    )(x, w, b)


def _dual_head(xi, wi, bi, xt, wt, bt, out_dtype):
    Bi, Di = xi.shape
    Bt, Dt = xt.shape
    Ep = wi.shape[1]
    flops = 2 * Bi * Di * Ep + 2 * Bt * Dt * Ep
    bytes_accessed = int(sum(a.size * a.dtype.itemsize
                             for a in (xi, wi, bi, xt, wt, bt))
                         + (Bi + Bt) * Ep * jnp.dtype(out_dtype).itemsize)
    return pl.pallas_call(
        _dual_head_kernel,
        out_shape=(jax.ShapeDtypeStruct((Bi, Ep), out_dtype),
                   jax.ShapeDtypeStruct((Bt, Ep), out_dtype)),
        in_specs=[_VMEM_SPEC] * 6,
        out_specs=(_VMEM_SPEC, _VMEM_SPEC),
        compiler_params=pltpu.CompilerParams(vmem_limit_bytes=_VMEM_LIMIT),
        cost_estimate=pl.CostEstimate(
            flops=flops, transcendentals=Bi + Bt,
            bytes_accessed=bytes_accessed),
    )(xi, wi, bi, xt, wt, bt)


# ----------------------------------------------------------------------------
# Glue (plain JAX): patchify, padding helpers
# ----------------------------------------------------------------------------
def _patchify(image_nchw, patch):
    B, C, H, W = image_nchw.shape
    x = image_nchw.reshape(B, C, H // patch, patch, W // patch, patch)
    x = x.transpose(0, 2, 4, 1, 3, 5)                 # [B, Hp, Wp, C, p, p]
    return x.reshape(B, (H // patch) * (W // patch), C * patch * patch)


def _round_up(n, m):
    return ((n + m - 1) // m) * m


def _pad_to(x, shape):
    return jnp.pad(x, [(0, s - d) for d, s in zip(x.shape, shape)])


# ----------------------------------------------------------------------------
# The wrapper (mirrors OpenClipWrapper semantics on TPU: autocast -> bf16)
# ----------------------------------------------------------------------------
class OpenClipWrapperPallas:
    # Batch rows padded to 16: bf16 packs two rows per sublane -> fully
    # populated packed output vregs (unmasked vst).
    _B_ALIGN = 16

    def __init__(self, key, device="tpu",
                 image_size=16, patch=8, channels=3,
                 vocab=64, seq=8, width=32, embed_dim=32):
        self.device = device
        # torch.device('cpu') -> float32 ; accelerator -> bf16 (TPU analogue
        # of `torch.bfloat16 if torch.cuda.is_bf16_supported() else float16`).
        self.dtype = jnp.float32 if device == "cpu" else jnp.bfloat16

        self.patch = patch
        self.embed_dim = embed_dim
        patch_dim = channels * patch * patch

        # Lane-aligned padded dims (per tower; no shared over-padding).
        self.Dp_img = _round_up(patch_dim, 128)   # 192 -> 256
        self.Dp_txt = _round_up(width, 128)       # 32  -> 128
        self.Ep = _round_up(embed_dim, 128)       # 32  -> 128

        ks = jax.random.split(key, 6)
        s = 0.02
        # Vision tower params.
        w1_img = jax.random.normal(ks[0], (patch_dim, width), jnp.float32) * s
        b1_img = jnp.zeros((1, width), jnp.float32)
        w2_img = jax.random.normal(ks[1], (width, embed_dim), jnp.float32) * s
        # Text tower params.
        self.tok_emb = jax.random.normal(ks[2], (vocab, width), jnp.float32) * s
        self.pos_emb = jax.random.normal(ks[3], (seq, width), jnp.float32) * s
        w1_txt = jax.random.normal(ks[4], (width, width), jnp.float32) * s
        b1_txt = jnp.zeros((1, width), jnp.float32)
        w2_txt = jax.random.normal(ks[5], (width, embed_dim), jnp.float32) * s

        # Fold the two linear projections (no nonlinearity between them):
        #   feat = (x @ w1 + b1) @ w2 == x @ (w1 @ w2) + (b1 @ w2)
        w12_img = w1_img @ w2_img                  # [patch_dim, embed_dim]
        b2_img = b1_img @ w2_img                   # [1, embed_dim]
        w12_txt = w1_txt @ w2_txt                  # [width, embed_dim]
        b2_txt = b1_txt @ w2_txt                   # [1, embed_dim]

        # Zero-pad to lane-aligned tiles; weights in autocast dtype, bias f32.
        self.w_img = _pad_to(w12_img, (self.Dp_img, self.Ep)).astype(self.dtype)
        self.b_img = _pad_to(b2_img, (1, self.Ep))                       # f32
        self.w_txt = _pad_to(w12_txt, (self.Dp_txt, self.Ep)).astype(self.dtype)
        self.b_txt = _pad_to(b2_txt, (1, self.Ep))                       # f32

        # CLIP logit scale (log(1/0.07)).
        self.logit_scale = jnp.log(jnp.float32(1.0 / 0.07))

    # ---- tower-specific pooling glue (linear -> pool before the matmul) ----
    def _image_pooled(self, image_nchw):
        patches = _patchify(image_nchw, self.patch)          # [B, T, C*P*P]
        pooled = jnp.mean(patches, axis=1)                   # [B, C*P*P] f32
        B = pooled.shape[0]
        Bp = _round_up(B, self._B_ALIGN)
        return _pad_to(pooled, (Bp, self.Dp_img)).astype(self.dtype), B

    def _text_pooled(self, text_tokens):
        emb = self.tok_emb[text_tokens] + self.pos_emb[None]  # [B, S, W] f32
        pooled = jnp.mean(emb, axis=1)                        # [B, W]
        B = pooled.shape[0]
        Bp = _round_up(B, self._B_ALIGN)
        return _pad_to(pooled, (Bp, self.Dp_txt)).astype(self.dtype), B

    # ---- public API mirroring OpenClipWrapper ------------------------------
    def encode_image(self, image):
        x, B = self._image_pooled(image)
        out = _single_head(x, self.w_img, self.b_img, self.dtype)
        return out[:B, :self.embed_dim]

    def encode_text(self, text):
        x, B = self._text_pooled(text)
        out = _single_head(x, self.w_txt, self.b_txt, self.dtype)
        return out[:B, :self.embed_dim]

    def __call__(self, image, text):
        # Mirrors open_clip CLIP.forward: normalized features + exp(scale).
        # Both towers run in a SINGLE no-grid pallas_call (one launch, no
        # pipeline bubble); image/text batch sizes may differ.
        xi, Bi = self._image_pooled(image)
        xt, Bt = self._text_pooled(text)
        oi, ot = _dual_head(xi, self.w_img, self.b_img,
                            xt, self.w_txt, self.b_txt, self.dtype)
        image_features = oi[:Bi, :self.embed_dim]
        text_features = ot[:Bt, :self.embed_dim]
        return image_features, text_features, jnp.exp(self.logit_scale)


if __name__ == "__main__":
    key = jax.random.PRNGKey(0)
    k_params, k_img, k_txt = jax.random.split(key, 3)

    # Small, CLIP-consistent shapes: NCHW image, int token ids.
    image = jax.random.normal(k_img, (2, 3, 16, 16), jnp.float32)
    text = jax.random.randint(k_txt, (2, 8), 0, 64, dtype=jnp.int32)

    model = OpenClipWrapperPallas(k_params, device="tpu")
    img_f, txt_f, scale = model(image, text)
    jax.block_until_ready((img_f, txt_f, scale))

    assert img_f.shape == (2, 32) and txt_f.shape == (2, 32)
    assert img_f.dtype == jnp.bfloat16 and txt_f.dtype == jnp.bfloat16

    # Exercise the single-tower entry points too.
    i_only = model.encode_image(image)
    t_only = model.encode_text(text)
    jax.block_until_ready((i_only, t_only))
    assert i_only.shape == (2, 32) and t_only.shape == (2, 32)

    print("KERNEL_OK")
</pallas_src>

<mosaic_0001>
module attributes {stable_mosaic.version = 11 : i64} {
  func.func @_dual_head_kernel(%arg0: memref<16x256xbf16, #tpu.memory_space<vmem>>, %arg1: memref<256x128xbf16, #tpu.memory_space<vmem>>, %arg2: memref<1x128xf32, #tpu.memory_space<vmem>>, %arg3: memref<16x128xbf16, #tpu.memory_space<vmem>>, %arg4: memref<128x128xbf16, #tpu.memory_space<vmem>>, %arg5: memref<1x128xf32, #tpu.memory_space<vmem>>, %arg6: memref<16x128xbf16, #tpu.memory_space<vmem>>, %arg7: memref<16x128xbf16, #tpu.memory_space<vmem>>) attributes {dimension_semantics = [], scalar_prefetch = 0 : i64, scratch_operands = 0 : i64, tpu.core_type = #tpu.core_type<tc>} {
    %c0 = arith.constant 0 : index
    %c0_0 = arith.constant 0 : index
    %0 = vector.load %arg0[%c0, %c0_0] : memref<16x256xbf16, #tpu.memory_space<vmem>>, vector<16x256xbf16>
    %c0_1 = arith.constant 0 : index
    %c0_2 = arith.constant 0 : index
    %1 = vector.load %arg1[%c0_1, %c0_2] : memref<256x128xbf16, #tpu.memory_space<vmem>>, vector<256x128xbf16>
    %cst = arith.constant dense<0.000000e+00> : vector<16x128xf32>
    %2 = tpu.matmul %0, %1, %cst {dimension_numbers = #tpu.dot_dimension_numbers<[1], [0], [0], [1], [0, 0, 1, 1], [], []>} : vector<16x256xbf16>, vector<256x128xbf16>, vector<16x128xf32> -> vector<16x128xf32>
    %c0_3 = arith.constant 0 : index
    %c0_4 = arith.constant 0 : index
    %3 = vector.load %arg2[%c0_3, %c0_4] : memref<1x128xf32, #tpu.memory_space<vmem>>, vector<1x128xf32>
    %4 = vector.broadcast %3 : vector<1x128xf32> to vector<16x128xf32>
    %5 = arith.addf %2, %4 : vector<16x128xf32>
    %6 = arith.mulf %5, %5 : vector<16x128xf32>
    %cst_5 = arith.constant dense<0.000000e+00> : vector<16xf32>
    %7 = vector.multi_reduction <add>, %6, %cst_5 [1] : vector<16x128xf32> to vector<16xf32>
    %8 = vector.shape_cast %7 : vector<16xf32> to vector<16x1xf32>
    %cst_6 = arith.constant 9.99999996E-13 : f32
    %9 = vector.broadcast %cst_6 : f32 to vector<16x1xf32>
    %10 = arith.addf %8, %9 : vector<16x1xf32>
    %11 = math.rsqrt %10 : vector<16x1xf32>
    %12 = vector.broadcast %11 : vector<16x1xf32> to vector<16x128xf32>
    %13 = arith.mulf %5, %12 : vector<16x128xf32>
    %14 = arith.truncf %13 : vector<16x128xf32> to vector<16x128xbf16>
    %c0_7 = arith.constant 0 : index
    %c0_8 = arith.constant 0 : index
    %15 = vector.load %arg6[%c0_7, %c0_8] : memref<16x128xbf16, #tpu.memory_space<vmem>>, vector<16x128xbf16>
    tpu.vector_store %arg6[%c0_7, %c0_8], %14 {strides = array<i32>} : memref<16x128xbf16, #tpu.memory_space<vmem>>, vector<16x128xbf16>,
    %c0_9 = arith.constant 0 : index
    %c0_10 = arith.constant 0 : index
    %16 = vector.load %arg3[%c0_9, %c0_10] : memref<16x128xbf16, #tpu.memory_space<vmem>>, vector<16x128xbf16>
    %c0_11 = arith.constant 0 : index
    %c0_12 = arith.constant 0 : index
    %17 = vector.load %arg4[%c0_11, %c0_12] : memref<128x128xbf16, #tpu.memory_space<vmem>>, vector<128x128xbf16>
    %cst_13 = arith.constant dense<0.000000e+00> : vector<16x128xf32>
    %18 = tpu.matmul %16, %17, %cst_13 {dimension_numbers = #tpu.dot_dimension_numbers<[1], [0], [0], [1], [0, 0, 1, 1], [], []>} : vector<16x128xbf16>, vector<128x128xbf16>, vector<16x128xf32> -> vector<16x128xf32>
    %c0_14 = arith.constant 0 : index
    %c0_15 = arith.constant 0 : index
    %19 = vector.load %arg5[%c0_14, %c0_15] : memref<1x128xf32, #tpu.memory_space<vmem>>, vector<1x128xf32>
    %20 = vector.broadcast %19 : vector<1x128xf32> to vector<16x128xf32>
    %21 = arith.addf %18, %20 : vector<16x128xf32>
    %22 = arith.mulf %21, %21 : vector<16x128xf32>
    %cst_16 = arith.constant dense<0.000000e+00> : vector<16xf32>
    %23 = vector.multi_reduction <add>, %22, %cst_16 [1] : vector<16x128xf32> to vector<16xf32>
    %24 = vector.shape_cast %23 : vector<16xf32> to vector<16x1xf32>
    %cst_17 = arith.constant 9.99999996E-13 : f32
    %25 = vector.broadcast %cst_17 : f32 to vector<16x1xf32>
    %26 = arith.addf %24, %25 : vector<16x1xf32>
    %27 = math.rsqrt %26 : vector<16x1xf32>
    %28 = vector.broadcast %27 : vector<16x1xf32> to vector<16x128xf32>
    %29 = arith.mulf %21, %28 : vector<16x128xf32>
    %30 = arith.truncf %29 : vector<16x128xf32> to vector<16x128xbf16>
    %c0_18 = arith.constant 0 : index
    %c0_19 = arith.constant 0 : index
    %31 = vector.load %arg7[%c0_18, %c0_19] : memref<16x128xbf16, #tpu.memory_space<vmem>>, vector<16x128xbf16>
    tpu.vector_store %arg7[%c0_18, %c0_19], %30 {strides = array<i32>} : memref<16x128xbf16, #tpu.memory_space<vmem>>, vector<16x128xbf16>,
    return
  }
}

</mosaic_0001>

<llo_original>
// kernel: tpu_custom_call.1
$region0: #{tpu_custom_call.1}
  #allocation0 [shape = 'u32[]', space=smem, size = 0x4, offset = 0x4, fixed_abs, tag = 'smem constant byte address 0x4 - core index']
  #allocation1 [shape = 'u32[144,128]{1,0:T(1,128)}', space=vmem, size = 0x12000, scoped, tag = 'internal scratch']
  %s0 = inlined_call_operand.hbm [shape: bf16[16,256], index: 0, kind: input, shape index: {}]
  %s1 = inlined_call_operand.hbm [shape: bf16[256,128], index: 1, kind: input, shape index: {}]
  %s2 = inlined_call_operand.vmem [shape: f32[1,128], index: 2, kind: input, shape index: {}]
  %s3 = inlined_call_operand.vmem [shape: bf16[16,128], index: 3, kind: input, shape index: {}]
  %s4 = inlined_call_operand.hbm [shape: bf16[128,128], index: 4, kind: input, shape index: {}]
  %s5 = inlined_call_operand.vmem [shape: f32[1,128], index: 5, kind: input, shape index: {}]
  %s6 = inlined_call_operand.hbm [shape: bf16[16,128], index: 6, kind: output, shape index: {0}]
  %s7 = inlined_call_operand.hbm [shape: bf16[16,128], index: 7, kind: output, shape index: {1}]
  %8 = xla_tuple %s6, %s7
  %s9 = sld [smem:[#allocation0]]
  $region54: #{tpu_custom_call.1} parent=0
    _
  %s11 = ssub.s32 1, %s9
  %s12 = scalar_select 0, %s11, %s9
  $region1: #{tpu_custom_call.1} parent=0
    #allocation2 [shape = 'u8[8192]{0}', space=vmem, size = 0x2000, scoped, tag = 'input window, operand 0, single buffered']
    #allocation3 [shape = 's32[1]{0}', space=sflag, size = 0x4, scoped, tag = 'scoped memory for tpu_custom_call.1']
    #allocation4 [shape = 's32[1]{0}', space=sflag, size = 0x4, scoped, tag = 'scoped memory for tpu_custom_call.1']
    #allocation5 [shape = 'u8[65536]{0}', space=vmem, size = 0x10000, scoped, tag = 'input window, operand 1, single buffered']
    #allocation6 [shape = 's32[1]{0}', space=sflag, size = 0x4, scoped, tag = 'scoped memory for tpu_custom_call.1']
    #allocation7 [shape = 'u8[32768]{0}', space=vmem, size = 0x8000, scoped, tag = 'input window, operand 4, single buffered']
    #allocation8 [shape = 'u8[4096]{0}', space=vmem, size = 0x1000, scoped, tag = 'output window, operand 0, single buffered']
    #allocation9 [shape = 'u8[4096]{0}', space=vmem, size = 0x1000, scoped, tag = 'output window, operand 1, single buffered']
    #allocation10 [shape = 's32[1]{0}', space=sflag, size = 0x4, scoped, tag = 'scoped memory for tpu_custom_call.1']
    %13 = vsyncpa [#allocation3], 0
    %14 = vsyncpa [#allocation6], 0
    %15 = vsyncpa [#allocation4], 0
    %16 = vsyncpa [#allocation10], 0
    // Predicated region
    $region2: #{tpu_custom_call.1} parent=1 // pred_check
      _
    $region3: #{tpu_custom_call.1} parent=1 // pred_check_branch
      %18 = sbr.rel (0) target = $region5
    $region4: #{tpu_custom_call.1} parent=1 // pred_region
      %s20 = ssub.s32 256, 256
      %21 = vsyncadd [#allocation3], %s20
      %s22 = sshll.u32 [#allocation2], 4
      %s23 = int_to_ptr.vmem [resolvable:$true] %s22
      %28 = dma.hbm_to_vmem [thread:$0]  %s0, 256, %s23, [#allocation3], 128, 128, 8
    $region5: #{tpu_custom_call.1} parent=1 // pred_fallthru
      _
    // Predicated region
    $region6: #{tpu_custom_call.1} parent=1 // pred_check
      _
    $region7: #{tpu_custom_call.1} parent=1 // pred_check_branch
      %30 = sbr.rel (0) target = $region9
    $region8: #{tpu_custom_call.1} parent=1 // pred_region
      %s32 = ssub.s32 2048, 2048
      %33 = vsyncadd [#allocation6], %s32
      %s34 = sshll.u32 [#allocation5], 4
      %s35 = int_to_ptr.vmem [resolvable:$true] %s34
      %40 = dma.hbm_to_vmem [thread:$0]  %s1, 2048, %s35, [#allocation6], 64, 64, 4
    $region9: #{tpu_custom_call.1} parent=1 // pred_fallthru
      _
    // Predicated region
    $region10: #{tpu_custom_call.1} parent=1 // pred_check
      _
    $region11: #{tpu_custom_call.1} parent=1 // pred_check_branch
      %42 = sbr.rel (0) target = $region13
    $region12: #{tpu_custom_call.1} parent=1 // pred_region
      _
    $region13: #{tpu_custom_call.1} parent=1 // pred_fallthru
      _
    // Predicated region
    $region14: #{tpu_custom_call.1} parent=1 // pred_check
      _
    $region15: #{tpu_custom_call.1} parent=1 // pred_check_branch
      %44 = sbr.rel (0) target = $region17
    $region16: #{tpu_custom_call.1} parent=1 // pred_region
      _
    $region17: #{tpu_custom_call.1} parent=1 // pred_fallthru
      _
    // Predicated region
    $region18: #{tpu_custom_call.1} parent=1 // pred_check
      _
    $region19: #{tpu_custom_call.1} parent=1 // pred_check_branch
      %46 = sbr.rel (0) target = $region21
    $region20: #{tpu_custom_call.1} parent=1 // pred_region
      %s48 = ssub.s32 1024, 1024
      %49 = vsyncadd [#allocation6], %s48
      %s50 = sshll.u32 [#allocation7], 4
      %s51 = int_to_ptr.vmem [resolvable:$true] %s50
      %56 = dma.hbm_to_vmem [thread:$0]  %s4, 1024, %s51, [#allocation6], 64, 64, 4
    $region21: #{tpu_custom_call.1} parent=1 // pred_fallthru
      _
    // Predicated region
    $region22: #{tpu_custom_call.1} parent=1 // pred_check
      _
    $region23: #{tpu_custom_call.1} parent=1 // pred_check_branch
      %58 = sbr.rel (0) target = $region25
    $region24: #{tpu_custom_call.1} parent=1 // pred_region
      _
    $region25: #{tpu_custom_call.1} parent=1 // pred_fallthru
      _
    // Predicated region
    $region26: #{tpu_custom_call.1} parent=1 // pred_check
      _
    $region27: #{tpu_custom_call.1} parent=1 // pred_check_branch
      %60 = sbr.rel (0) target = $region29
    $region28: #{tpu_custom_call.1} parent=1 // pred_region
      %61 = dma.done [#allocation3], 256
    $region29: #{tpu_custom_call.1} parent=1 // pred_fallthru
      _
    // Predicated region
    $region30: #{tpu_custom_call.1} parent=1 // pred_check
      _
    $region31: #{tpu_custom_call.1} parent=1 // pred_check_branch
      %63 = sbr.rel (0) target = $region33
    $region32: #{tpu_custom_call.1} parent=1 // pred_region
      %64 = dma.done [#allocation6], 2048
    $region33: #{tpu_custom_call.1} parent=1 // pred_fallthru
      _
    // Predicated region
    $region34: #{tpu_custom_call.1} parent=1 // pred_check
      _
    $region35: #{tpu_custom_call.1} parent=1 // pred_check_branch
      %66 = sbr.rel (0) target = $region37
    $region36: #{tpu_custom_call.1} parent=1 // pred_region
      %67 = dma.done [#allocation6], 1024
    $region37: #{tpu_custom_call.1} parent=1 // pred_fallthru
      _
    %v69 = vld [vmem:[#allocation2] sm:$0xff]
    %v70 = vld [vmem:[#allocation2 + $0x8] sm:$0xff]
    %v71 = vld [vmem:[#allocation5] sm:$0xf]
    %v72 = vld [vmem:[#allocation5 + $0x4] sm:$0xf]
    %v73 = vld [vmem:[#allocation5 + $0x8] sm:$0xf]
    %v74 = vld [vmem:[#allocation5 + $0xc] sm:$0xf]
    %v75 = vld [vmem:[#allocation5 + $0x10] sm:$0xf]
    %v76 = vld [vmem:[#allocation5 + $0x14] sm:$0xf]
    %v77 = vld [vmem:[#allocation5 + $0x18] sm:$0xf]
    %v78 = vld [vmem:[#allocation5 + $0x1c] sm:$0xf]
    %v79 = vld [vmem:[#allocation5 + $0x20] sm:$0xf]
    %v80 = vld [vmem:[#allocation5 + $0x24] sm:$0xf]
    %v81 = vld [vmem:[#allocation5 + $0x28] sm:$0xf]
    %v82 = vld [vmem:[#allocation5 + $0x2c] sm:$0xf]
    %v83 = vld [vmem:[#allocation5 + $0x30] sm:$0xf]
    %v84 = vld [vmem:[#allocation5 + $0x34] sm:$0xf]
    %v85 = vld [vmem:[#allocation5 + $0x38] sm:$0xf]
    %v86 = vld [vmem:[#allocation5 + $0x3c] sm:$0xf]
    %v87 = vld [vmem:[#allocation5 + $0x40] sm:$0xf]
    %v88 = vld [vmem:[#allocation5 + $0x44] sm:$0xf]
    %v89 = vld [vmem:[#allocation5 + $0x48] sm:$0xf]
    %v90 = vld [vmem:[#allocation5 + $0x4c] sm:$0xf]
    %v91 = vld [vmem:[#allocation5 + $0x50] sm:$0xf]
    %v92 = vld [vmem:[#allocation5 + $0x54] sm:$0xf]
    %v93 = vld [vmem:[#allocation5 + $0x58] sm:$0xf]
    %v94 = vld [vmem:[#allocation5 + $0x5c] sm:$0xf]
    %v95 = vld [vmem:[#allocation5 + $0x60] sm:$0xf]
    %v96 = vld [vmem:[#allocation5 + $0x64] sm:$0xf]
    %v97 = vld [vmem:[#allocation5 + $0x68] sm:$0xf]
    %v98 = vld [vmem:[#allocation5 + $0x6c] sm:$0xf]
    %v99 = vld [vmem:[#allocation5 + $0x70] sm:$0xf]
    %v100 = vld [vmem:[#allocation5 + $0x74] sm:$0xf]
    %v101 = vld [vmem:[#allocation5 + $0x78] sm:$0xf]
    %v102 = vld [vmem:[#allocation5 + $0x7c] sm:$0xf]
    %v103 = vld [vmem:[%s2] sm:$0x1]
    %v105 = vlaneseq
    %v106 = vshrl.u32 %v105, 7
    %v107 = vsub.s32 0, %v106
    %v108 = vrot.slane %v103, %v107
    %v112 = vunpack.c.l.b16 %v69
    %v113 = vunpack.c.h.b16 %v69
    %v114 = vunpack.c.l.b16 %v70
    %v115 = vunpack.c.h.b16 %v70
    %v116 = vpack.c.b16 %v114, %v112
    %v117 = vpack.c.b16 %v115, %v113
    %v152 = vunpack.c.l.b16 %v71
    %v153 = vunpack.c.l.b16 %v72
    %v154 = vunpack.c.l.b16 %v73
    %v155 = vunpack.c.l.b16 %v74
    %v156 = vunpack.c.l.b16 %v75
    %v157 = vunpack.c.l.b16 %v76
    %v158 = vunpack.c.l.b16 %v77
    %v159 = vunpack.c.l.b16 %v78
    %v160 = vunpack.c.l.b16 %v79
    %v161 = vunpack.c.l.b16 %v80
    %v162 = vunpack.c.l.b16 %v81
    %v163 = vunpack.c.l.b16 %v82
    %v164 = vunpack.c.l.b16 %v83
    %v165 = vunpack.c.l.b16 %v84
    %v166 = vunpack.c.l.b16 %v85
    %v167 = vunpack.c.l.b16 %v86
    %v168 = vunpack.c.l.b16 %v87
    %v169 = vunpack.c.l.b16 %v88
    %v170 = vunpack.c.l.b16 %v89
    %v171 = vunpack.c.l.b16 %v90
    %v172 = vunpack.c.l.b16 %v91
    %v173 = vunpack.c.l.b16 %v92
    %v174 = vunpack.c.l.b16 %v93
    %v175 = vunpack.c.l.b16 %v94
    %v176 = vunpack.c.l.b16 %v95
    %v177 = vunpack.c.l.b16 %v96
    %v178 = vunpack.c.l.b16 %v97
    %v179 = vunpack.c.l.b16 %v98
    %v180 = vunpack.c.l.b16 %v99
    %v181 = vunpack.c.l.b16 %v100
    %v182 = vunpack.c.l.b16 %v101
    %v183 = vunpack.c.l.b16 %v102
    %v184 = vpack.c.b16 %v153, %v152
    %v185 = vpack.c.b16 %v155, %v154
    %v186 = vpack.c.b16 %v157, %v156
    %v187 = vpack.c.b16 %v159, %v158
    %v188 = vpack.c.b16 %v161, %v160
    %v189 = vpack.c.b16 %v163, %v162
    %v190 = vpack.c.b16 %v165, %v164
    %v191 = vpack.c.b16 %v167, %v166
    %v192 = vpack.c.b16 %v169, %v168
    %v193 = vpack.c.b16 %v171, %v170
    %v194 = vpack.c.b16 %v173, %v172
    %v195 = vpack.c.b16 %v175, %v174
    %v196 = vpack.c.b16 %v177, %v176
    %v197 = vpack.c.b16 %v179, %v178
    %v198 = vpack.c.b16 %v181, %v180
    %v199 = vpack.c.b16 %v183, %v182
    %216 = vmatprep.subr.bf16.mxu0 0
    %217 = vmatpush1.bf16.msra.mxu0 %v184
    %218 = vmatprep.subr.bf16.mxu0 0
    %219 = vmatpush1.bf16.msra.mxu0 %v185
    %220 = vmatprep.subr.bf16.mxu0 0
    %221 = vmatpush1.bf16.msra.mxu0 %v186
    %222 = vmatprep.subr.bf16.mxu0 0
    %223 = vmatpush1.bf16.msra.mxu0 %v187
    %224 = vmatprep.subr.bf16.mxu0 0
    %225 = vmatpush1.bf16.msra.mxu0 %v188
    %226 = vmatprep.subr.bf16.mxu0 0
    %227 = vmatpush1.bf16.msra.mxu0 %v189
    %228 = vmatprep.subr.bf16.mxu0 0
    %229 = vmatpush1.bf16.msra.mxu0 %v190
    %230 = vmatprep.subr.bf16.mxu0 0
    %231 = vmatpush1.bf16.msra.mxu0 %v191
    %232 = vmatprep.subr.bf16.mxu0 0
    %233 = vmatpush1.bf16.msra.mxu0 %v192
    %234 = vmatprep.subr.bf16.mxu0 0
    %235 = vmatpush1.bf16.msra.mxu0 %v193
    %236 = vmatprep.subr.bf16.mxu0 0
    %237 = vmatpush1.bf16.msra.mxu0 %v194
    %238 = vmatprep.subr.bf16.mxu0 0
    %239 = vmatpush1.bf16.msra.mxu0 %v195
    %240 = vmatprep.subr.bf16.mxu0 0
    %241 = vmatpush1.bf16.msra.mxu0 %v196
    %242 = vmatprep.subr.bf16.mxu0 0
    %243 = vmatpush1.bf16.msra.mxu0 %v197
    %244 = vmatprep.subr.bf16.mxu0 0
    %245 = vmatpush1.bf16.msra.mxu0 %v198
    %246 = vmatprep.subr.bf16.mxu0 0
    %247 = vmatpush1.bf16.msra.mxu0 %v199
    %248 = vmatprep.mubr.bf16.mxu0 %v117
    %249 = vmatmul.mubr.bf16.gmra.mrb[0].mxu0 %v116
    %v250 = vpop.f32.mrb[0].mxu0
    %v251 = vadd.f32 %v108, %v250
    %v252 = vpop.f32.mrb[0].mxu0
    %v253 = vpop.f32.mrb[0].mxu0
    %v254 = vadd.f32 %v108, %v253
    %v255 = vpop.f32.mrb[0].mxu0
    %256 = vdwg.mxu0
    %v257 = vmul.f32 %v251, %v251
    %v258 = vmul.f32 %v254, %v254
    %259 = vadd.xlane.f32.xlu0 %v257
    %v260 = vpop.xlane.xlu0 %259
    %261 = vadd.xlane.f32.xlu0 %v258
    %v262 = vpop.xlane.xlu0 %261
    %v263 = vadd.f32 %v260, 1e-12
    %v264 = vadd.f32 %v262, 1e-12
    %v265 = vrsqrt.pop %v263
    %v266 = vrsqrt.pop %v264
    %v267 = vmul.f32 %v251, %v265
    %v268 = vmul.f32 %v254, %v266
    %v269 = vpack.c.bf16 %v268, %v267
    %v271 = vunpack.c.l.b16 %v269
    %v272 = vunpack.c.h.b16 %v269
    %v273 = vpack.c.b16 %v271, %v271
    %v274 = vpack.c.b16 %v272, %v272
    %277 = vst [vmem:[#allocation8] sm:$0xf] %v273
    %278 = vst [vmem:[#allocation8 + $0x4] sm:$0xf] %v274
    %v279 = vld [vmem:[%s3] sm:$0xf]
    %v280 = vld [vmem:[%s3 + $0x4] sm:$0xf]
    %v281 = vld [vmem:[#allocation7] sm:$0xf]
    %v282 = vld [vmem:[#allocation7 + $0x4] sm:$0xf]
    %v283 = vld [vmem:[#allocation7 + $0x8] sm:$0xf]
    %v284 = vld [vmem:[#allocation7 + $0xc] sm:$0xf]
    %v285 = vld [vmem:[#allocation7 + $0x10] sm:$0xf]
    %v286 = vld [vmem:[#allocation7 + $0x14] sm:$0xf]
    %v287 = vld [vmem:[#allocation7 + $0x18] sm:$0xf]
    %v288 = vld [vmem:[#allocation7 + $0x1c] sm:$0xf]
    %v289 = vld [vmem:[#allocation7 + $0x20] sm:$0xf]
    %v290 = vld [vmem:[#allocation7 + $0x24] sm:$0xf]
    %v291 = vld [vmem:[#allocation7 + $0x28] sm:$0xf]
    %v292 = vld [vmem:[#allocation7 + $0x2c] sm:$0xf]
    %v293 = vld [vmem:[#allocation7 + $0x30] sm:$0xf]
    %v294 = vld [vmem:[#allocation7 + $0x34] sm:$0xf]
    %v295 = vld [vmem:[#allocation7 + $0x38] sm:$0xf]
    %v296 = vld [vmem:[#allocation7 + $0x3c] sm:$0xf]
    %v297 = vld [vmem:[%s5] sm:$0x1]
    %v299 = vlaneseq
    %v300 = vshrl.u32 %v299, 7
    %v301 = vsub.s32 0, %v300
    %v302 = vrot.slane %v297, %v301
    %v306 = vunpack.c.l.b16 %v279
    %v307 = vunpack.c.l.b16 %v280
    %v308 = vpack.c.b16 %v307, %v306
    %v326 = vunpack.c.l.b16 %v281
    %v327 = vunpack.c.l.b16 %v282
    %v328 = vunpack.c.l.b16 %v283
    %v329 = vunpack.c.l.b16 %v284
    %v330 = vunpack.c.l.b16 %v285
    %v331 = vunpack.c.l.b16 %v286
    %v332 = vunpack.c.l.b16 %v287
    %v333 = vunpack.c.l.b16 %v288
    %v334 = vunpack.c.l.b16 %v289
    %v335 = vunpack.c.l.b16 %v290
    %v336 = vunpack.c.l.b16 %v291
    %v337 = vunpack.c.l.b16 %v292
    %v338 = vunpack.c.l.b16 %v293
    %v339 = vunpack.c.l.b16 %v294
    %v340 = vunpack.c.l.b16 %v295
    %v341 = vunpack.c.l.b16 %v296
    %v342 = vpack.c.b16 %v327, %v326
    %v343 = vpack.c.b16 %v329, %v328
    %v344 = vpack.c.b16 %v331, %v330
    %v345 = vpack.c.b16 %v333, %v332
    %v346 = vpack.c.b16 %v335, %v334
    %v347 = vpack.c.b16 %v337, %v336
    %v348 = vpack.c.b16 %v339, %v338
    %v349 = vpack.c.b16 %v341, %v340
    %358 = vmatprep.subr.bf16.mxu0 0
    %359 = vmatpush1.bf16.msra.mxu0 %v342
    %360 = vmatprep.subr.bf16.mxu0 0
    %361 = vmatpush1.bf16.msra.mxu0 %v343
    %362 = vmatprep.subr.bf16.mxu0 0
    %363 = vmatpush1.bf16.msra.mxu0 %v344
    %364 = vmatprep.subr.bf16.mxu0 0
    %365 = vmatpush1.bf16.msra.mxu0 %v345
    %366 = vmatprep.subr.bf16.mxu0 0
    %367 = vmatpush1.bf16.msra.mxu0 %v346
    %368 = vmatprep.subr.bf16.mxu0 0
    %369 = vmatpush1.bf16.msra.mxu0 %v347
    %370 = vmatprep.subr.bf16.mxu0 0
    %371 = vmatpush1.bf16.msra.mxu0 %v348
    %372 = vmatprep.subr.bf16.mxu0 0
    %373 = vmatpush1.bf16.msra.mxu0 %v349
    %374 = vmatprep.subr.bf16.mxu0 0
    %375 = vmatpush1.bf16.msra.mxu0 0
    %376 = vmatprep.subr.bf16.mxu0 0
    %377 = vmatpush1.bf16.msra.mxu0 0
    %378 = vmatprep.subr.bf16.mxu0 0
    %379 = vmatpush1.bf16.msra.mxu0 0
    %380 = vmatprep.subr.bf16.mxu0 0
    %381 = vmatpush1.bf16.msra.mxu0 0
    %382 = vmatprep.subr.bf16.mxu0 0
    %383 = vmatpush1.bf16.msra.mxu0 0
    %384 = vmatprep.subr.bf16.mxu0 0
    %385 = vmatpush1.bf16.msra.mxu0 0
    %386 = vmatprep.subr.bf16.mxu0 0
    %387 = vmatpush1.bf16.msra.mxu0 0
    %388 = vmatprep.subr.bf16.mxu0 0
    %389 = vmatpush1.bf16.msra.mxu0 0
    %390 = vmatprep.mubr.bf16.mxu0 0
    %391 = vmatmul.mubr.bf16.gmra.mrb[0].mxu0 %v308
    %v392 = vpop.f32.mrb[0].mxu0
    %v393 = vadd.f32 %v302, %v392
    %v394 = vpop.f32.mrb[0].mxu0
    %v395 = vpop.f32.mrb[0].mxu0
    %v396 = vadd.f32 %v302, %v395
    %v397 = vpop.f32.mrb[0].mxu0
    %398 = vdwg.mxu0
    %v399 = vmul.f32 %v393, %v393
    %v400 = vmul.f32 %v396, %v396
    %401 = vadd.xlane.f32.xlu0 %v399
    %v402 = vpop.xlane.xlu0 %401
    %403 = vadd.xlane.f32.xlu0 %v400
    %v404 = vpop.xlane.xlu0 %403
    %v405 = vadd.f32 %v402, 1e-12
    %v406 = vadd.f32 %v404, 1e-12
    %v407 = vrsqrt.pop %v405
    %v408 = vrsqrt.pop %v406
    %v409 = vmul.f32 %v393, %v407
    %v410 = vmul.f32 %v396, %v408
    %v411 = vpack.c.bf16 %v410, %v409
    %v413 = vunpack.c.l.b16 %v411
    %v414 = vunpack.c.h.b16 %v411
    %v415 = vpack.c.b16 %v413, %v413
    %v416 = vpack.c.b16 %v414, %v414
    %419 = vst [vmem:[#allocation9] sm:$0xf] %v415
    %420 = vst [vmem:[#allocation9 + $0x4] sm:$0xf] %v416
    // Predicated region
    $region38: #{tpu_custom_call.1} parent=1 // pred_check
      _
    $region39: #{tpu_custom_call.1} parent=1 // pred_check_branch
      %422 = sbr.rel (0) target = $region41
    $region40: #{tpu_custom_call.1} parent=1 // pred_region
      %s424 = ssub.s32 128, 128
      %425 = vsyncadd [#allocation4], %s424
      %s426 = sshll.u32 [#allocation8], 4
      %s427 = int_to_ptr.vmem [resolvable:$true] %s426
      %432 = dma.vmem_to_hbm [thread:$0]  %s427, 128, %s6, [#allocation4], 64, 64, 4
    $region41: #{tpu_custom_call.1} parent=1 // pred_fallthru
      _
    // Predicated region
    $region42: #{tpu_custom_call.1} parent=1 // pred_check
      _
    $region43: #{tpu_custom_call.1} parent=1 // pred_check_branch
      %434 = sbr.rel (0) target = $region45
    $region44: #{tpu_custom_call.1} parent=1 // pred_region
      %s436 = ssub.s32 128, 128
      %437 = vsyncadd [#allocation10], %s436
      %s438 = sshll.u32 [#allocation9], 4
      %s439 = int_to_ptr.vmem [resolvable:$true] %s438
      %444 = dma.vmem_to_hbm [thread:$0]  %s439, 128, %s7, [#allocation10], 64, 64, 4
    $region45: #{tpu_custom_call.1} parent=1 // pred_fallthru
      _
    // Predicated region
    $region46: #{tpu_custom_call.1} parent=1 // pred_check
      _
    $region47: #{tpu_custom_call.1} parent=1 // pred_check_branch
      %446 = sbr.rel (0) target = $region49
    $region48: #{tpu_custom_call.1} parent=1 // pred_region
      %447 = dma.done [#allocation4], 128
    $region49: #{tpu_custom_call.1} parent=1 // pred_fallthru
      _
    // Predicated region
    $region50: #{tpu_custom_call.1} parent=1 // pred_check
      _
    $region51: #{tpu_custom_call.1} parent=1 // pred_check_branch
      %449 = sbr.rel (0) target = $region53
    $region52: #{tpu_custom_call.1} parent=1 // pred_region
      %450 = dma.done [#allocation10], 128
    $region53: #{tpu_custom_call.1} parent=1 // pred_fallthru
      _
    %451 = vsyncpa [#allocation3], 1
    %452 = vsyncpa [#allocation6], 1
    %453 = vsyncpa [#allocation4], 1
    %454 = vsyncpa [#allocation10], 1

</llo_original>
